<compile_context>
chip_gen: v7x
topology: tpu7x:2x2x1
jax: 0.10.0
libtpu: 0.0.40
codegen_flags: <defaults>
</compile_context>

<pallas_src>
import math

import jax
import jax.numpy as jnp
from jax.experimental import pallas as pl
from jax.experimental.pallas import tpu as pltpu

WEIGHTBITS = 8
OUTBITS = 5
OUTMAX = 1.2
# symmetric_linear_quantization_params(5, 1.2) -> scale = (2^4 - 1) / 1.2 = 12.5, zp = 0
QSCALE = float((2 ** (OUTBITS - 1) - 1) / OUTMAX)
INV_QSCALE = float(1.0 / QSCALE)


def _coefs():
    n = float(2 ** (WEIGHTBITS - 1) - 1)
    return jnp.array(
        [-(2 ** (WEIGHTBITS - 1)) / n]
        + [2.0 ** (i - 1) / n for i in range(1, WEIGHTBITS)],
        dtype=jnp.float32,
    )


def _im2col(x, k, stride, padding):
    """x: (N, C, H, W) -> patches (N, C, k*k, Ho*Wo) float32, plus Ho, Wo."""
    N, C, H, W = x.shape
    Ho = (H + 2 * padding - k) // stride + 1
    Wo = (W + 2 * padding - k) // stride + 1
    xp = jnp.pad(x, ((0, 0), (0, 0), (padding, padding), (padding, padding)))
    cols = []
    for dy in range(k):
        for dx in range(k):
            cols.append(xp[:, :, dy:dy + stride * Ho:stride, dx:dx + stride * Wo:stride])
    p = jnp.stack(cols, axis=2)                         # (N, C, K, Ho, Wo)
    return p.reshape(N, C, k * k, Ho * Wo).astype(jnp.float32), Ho, Wo


def _pick_tile(hw, R, CK, OC):
    """Largest hw-tile (multiple of 128) whose working set fits a VMEM budget."""
    budget = 24 << 20                       # headroom under the 32 MiB scoped limit
    hw128 = max(128, ((hw + 127) // 128) * 128)
    for t in (2048, 1024, 512, 256, 128):
        if t > hw128:
            continue
        need = (2 * CK * t * 2              # double-buffered bf16 patch tiles
                + R * CK * 2                # resident bf16 block-diagonal weight
                + OC * R * 4 + R * 4        # resident f32 coef matrix + bias
                + 2 * R * t * 4             # y / q f32 intermediates
                + 2 * OC * t * 4)           # double-buffered f32 output tiles
        if need <= budget:
            return t
    return 128


def _split_conv_kernel(p_ref, w_ref, b_ref, s_ref, out_ref):
    """One (image, hw) tile:  out(OC, thw) = S @ round(W_bd @ P + bias).

    p_ref  : (CK, thw)   bf16 im2col patches for one image tile (pixels on lanes)
    w_ref  : (R, CK)     bf16 block-diagonal per-(bit, channel) weights * QSCALE (resident)
    b_ref  : (R, 1)      f32  per-(bit, channel, oc) bias * QSCALE (resident)
    s_ref  : (OC, R)     f32  coef[b] * INV_QSCALE * (o == oc) reduction matrix (resident)
    out_ref: (OC, thw)   f32
    """
    y = jnp.dot(w_ref[...], p_ref[...], preferred_element_type=jnp.float32)
    # LinearQuantizeSTE forward (zero_point = 0, no clamp), with the scale folded
    # into the operands on the host: q = round(QSCALE * conv_out).
    q = jnp.round(y + b_ref[...])
    # Coefficients (and 1/QSCALE) applied AFTER rounding, fused with the
    # (bit, channel) reduction; kept in f32 so this step is exact.
    out_ref[...] = jnp.dot(s_ref[...], q, preferred_element_type=jnp.float32)


def demolition_splitweight_conv2d(x, weight, bias, *, stride=1, padding=0):
    """
    x:      (N, C, H, W)               float32, NCHW
    weight: (B, C, OC, 1, k, k)        float32  (per-bit, per-input-channel conv weights)
    bias:   (B, C, OC)                 float32
    returns (N, OC, Ho, Wo)            float32, NCHW
    """
    N, C, H, W = x.shape
    B, C2, OC, one, kh, kw = weight.shape
    assert B == WEIGHTBITS and C2 == C and one == 1 and kh == kw
    k = kh
    K = k * k
    CK = C * K
    R = B * C * OC

    p4, Ho, Wo = _im2col(x, k, stride, padding)             # (N, C, K, HW)
    HW = Ho * Wo
    patches = p4.reshape(N, CK, HW)

    # hw-tile sized off the full per-tile working set (not just the weights),
    # so the kernel fits v7x's 64 MiB VMEM / v5e's 16 MiB default scoped limit.
    thw = _pick_tile(HW, R, CK, OC)
    HWp = int(pl.cdiv(HW, thw)) * thw
    if HWp != HW:
        patches = jnp.pad(patches, ((0, 0), (0, 0), (0, HWp - HW)))
    patches = patches.astype(jnp.bfloat16)

    # Block-diagonal weights (QSCALE pre-folded): row block (b, c) holds
    # QSCALE * W[b, c] in the column range of channel c, zeros elsewhere.
    w_k = weight.reshape(B, C, OC, K).astype(jnp.float32) * QSCALE
    eye_c = jnp.eye(C, dtype=jnp.float32)
    w_bd = jnp.einsum('bcok,cd->bcodk', w_k, eye_c).reshape(R, CK).astype(jnp.bfloat16)

    # Resident bias column (QSCALE pre-folded), row order (b, c, o).
    b_col = (bias.astype(jnp.float32) * QSCALE).reshape(R, 1)

    # S[oc, (b*C + c)*OC + o] = coef[b] * INV_QSCALE * (o == oc) — applied after round.
    coefs = _coefs()                                        # (B,)
    s_mat = (jnp.broadcast_to(
        coefs[None, :, None, None]
        * jnp.eye(OC, dtype=jnp.float32)[:, None, None, :],
        (OC, B, C, OC)).reshape(OC, R)) * INV_QSCALE

    # TODO(synk): channel-grouped fallback (extra reduction grid axis) needed when
    # the folded weight outgrows VMEM or C*K exceeds the MXU contraction depth.
    assert R * CK * 2 + OC * R * 4 <= 8 * 2 ** 20, "folded weight too large for this kernel"

    grid = (N, HWp // thw)
    # Note for v7x: with 2 TensorCores sharing the grid, an even total block count
    # (N * HWp//thw) gives balanced work; not forced here to avoid padded compute
    # on single-TC v5e/v6e.

    out = pl.pallas_call(
        _split_conv_kernel,
        out_shape=jax.ShapeDtypeStruct((N, OC, HWp), jnp.float32),
        grid_spec=pltpu.PrefetchScalarGridSpec(
            num_scalar_prefetch=0,
            grid=grid,
            in_specs=[
                pl.BlockSpec((None, CK, thw), lambda n, m: (n, 0, m)),
                pl.BlockSpec((R, CK), lambda n, m: (0, 0)),   # resident, DMA'd once
                pl.BlockSpec((R, 1), lambda n, m: (0, 0)),    # resident, DMA'd once
                pl.BlockSpec((OC, R), lambda n, m: (0, 0)),   # resident, DMA'd once
            ],
            out_specs=pl.BlockSpec((None, OC, thw), lambda n, m: (n, 0, m)),
        ),
        compiler_params=pltpu.CompilerParams(
            dimension_semantics=("parallel", "parallel"),
            vmem_limit_bytes=32 * 1024 * 1024,
        ),
    )(patches, w_bd, b_col, s_mat)

    # (N, OC, HWp) -> (N, OC, Ho, Wo): no transpose, just slice off the hw padding.
    return out[:, :, :HW].reshape(N, OC, Ho, Wo)


def _reference_exact(x, weight, bias, stride, padding):
    """Pure-JAX f32 reference (same math as the PyTorch module, no Pallas)."""
    N, C, H, W = x.shape
    B, _, OC, _, k, _ = weight.shape
    p, Ho, Wo = _im2col(x, k, stride, padding)              # (N, C, K, HW)
    wmat = weight.reshape(B, C, OC, k * k).astype(jnp.float32)
    y = jnp.einsum('bcok,nckm->bcnom', wmat, p) + bias[:, :, None, :, None]
    q = jnp.round(y * QSCALE) * INV_QSCALE
    out = jnp.einsum('b,bcnom->nom', _coefs(), q)           # sum over bits and channels
    return out.reshape(N, OC, Ho, Wo)


def _reference_bf16(x, weight, bias, stride, padding):
    """Pure-JAX reference mirroring the kernel's arithmetic (bf16 inputs to matmul-1,
    f32 accumulation, QSCALE folded, exact f32 coefficient reduction)."""
    N, C, H, W = x.shape
    B, _, OC, _, k, _ = weight.shape
    p, Ho, Wo = _im2col(x, k, stride, padding)              # (N, C, K, HW)
    w_s = (weight.reshape(B, C, OC, k * k).astype(jnp.float32) * QSCALE).astype(jnp.bfloat16)
    p_b = p.astype(jnp.bfloat16)
    y = jnp.einsum('bcok,nckm->bcnom', w_s, p_b,
                   preferred_element_type=jnp.float32)
    y = y + (bias.astype(jnp.float32) * QSCALE)[:, :, None, :, None]
    q = jnp.round(y)
    out = jnp.einsum('b,bcnom->nom', _coefs() * INV_QSCALE, q)
    return out.reshape(N, OC, Ho, Wo)


if __name__ == "__main__":
    key = jax.random.PRNGKey(0)
    kx, kw_key, kb_key = jax.random.split(key, 3)

    # Small, module-consistent shapes.
    N, C, H, W = 2, 4, 16, 16
    OC, k, stride, padding = 8, 3, 1, 1

    x = jax.random.normal(kx, (N, C, H, W), dtype=jnp.float32)

    # Deterministic "PyTorch-like" init for each of the B*C Conv2d(1, OC, k) layers.
    fan_in = 1 * k * k
    bound = 1.0 / math.sqrt(fan_in)
    weight = jax.random.uniform(kw_key, (WEIGHTBITS, C, OC, 1, k, k),
                                dtype=jnp.float32, minval=-bound, maxval=bound)
    bias = jax.random.uniform(kb_key, (WEIGHTBITS, C, OC),
                              dtype=jnp.float32, minval=-bound, maxval=bound)

    out = demolition_splitweight_conv2d(x, weight, bias, stride=stride, padding=padding)
    out = jax.block_until_ready(out)
    assert out.shape == (N, OC, H, W), out.shape

    # Structural check: vs a reference doing the exact same bf16-input / f32-acc
    # arithmetic, differences can only come from rare .5 round ties flipping under
    # different f32 accumulation orders (each flip bounded by |coef|/12.5 <= ~0.08).
    ref_b = _reference_bf16(x, weight, bias, stride, padding)
    d_struct = float(jnp.max(jnp.abs(out - ref_b)))
    assert d_struct < 0.3, f"max diff vs bf16-arithmetic reference: {d_struct}"

    # Accuracy check: vs the exact f32 module semantics. bf16 input rounding shifts
    # the round() argument by a few % of a quantization step, so a small number of
    # +-coef/12.5 flips per output pixel is expected; bound the degradation.
    ref_e = _reference_exact(x, weight, bias, stride, padding)
    d_exact_max = float(jnp.max(jnp.abs(out - ref_e)))
    d_exact_mean = float(jnp.mean(jnp.abs(out - ref_e)))
    assert d_exact_max < 1.0, f"max diff vs exact reference: {d_exact_max}"
    assert d_exact_mean < 0.1, f"mean diff vs exact reference: {d_exact_mean}"

    print("KERNEL_OK")
</pallas_src>

<mosaic_0001>
module attributes {stable_mosaic.version = 11 : i64} {
  func.func @_split_conv_kernel(%arg0: i32, %arg1: i32, %arg2: memref<1x36x256xbf16, #tpu.memory_space<vmem>>, %arg3: memref<256x36xbf16, #tpu.memory_space<vmem>>, %arg4: memref<256x1xf32, #tpu.memory_space<vmem>>, %arg5: memref<8x256xf32, #tpu.memory_space<vmem>>, %arg6: memref<1x8x256xf32, #tpu.memory_space<vmem>>) attributes {dimension_semantics = [#tpu.dimension_semantics<parallel>, #tpu.dimension_semantics<parallel>], iteration_bounds = array<i64: 2, 1>, scalar_prefetch = 0 : i64, scratch_operands = 0 : i64, tpu.core_type = #tpu.core_type<tc>, window_params = [{transform_indices = @transform_0, window_bounds = array<i64: 1, 36, 256>}, {pipeline_mode = #tpu.pipeline_mode<synchronous>, transform_indices = @transform_1, window_bounds = array<i64: 256, 36>}, {pipeline_mode = #tpu.pipeline_mode<synchronous>, transform_indices = @transform_2, window_bounds = array<i64: 256, 1>}, {pipeline_mode = #tpu.pipeline_mode<synchronous>, transform_indices = @transform_3, window_bounds = array<i64: 8, 256>}, {transform_indices = @transform_4, window_bounds = array<i64: 1, 8, 256>}]} {
    %c0 = arith.constant 0 : index
    %c0_0 = arith.constant 0 : index
    %0 = vector.load %arg3[%c0, %c0_0] : memref<256x36xbf16, #tpu.memory_space<vmem>>, vector<256x36xbf16>
    %c0_1 = arith.constant 0 : index
    %c0_2 = arith.constant 0 : index
    %c0_3 = arith.constant 0 : index
    %1 = vector.load %arg2[%c0_1, %c0_2, %c0_3] : memref<1x36x256xbf16, #tpu.memory_space<vmem>>, vector<1x36x256xbf16>
    %2 = vector.shape_cast %1 : vector<1x36x256xbf16> to vector<36x256xbf16>
    %cst = arith.constant dense<0.000000e+00> : vector<256x256xf32>
    %3 = tpu.matmul %0, %2, %cst {dimension_numbers = #tpu.dot_dimension_numbers<[1], [0], [0], [1], [0, 0, 1, 1], [], []>} : vector<256x36xbf16>, vector<36x256xbf16>, vector<256x256xf32> -> vector<256x256xf32>
    %c0_4 = arith.constant 0 : index
    %c0_5 = arith.constant 0 : index
    %4 = vector.load %arg4[%c0_4, %c0_5] : memref<256x1xf32, #tpu.memory_space<vmem>>, vector<256x1xf32>
    %5 = vector.broadcast %4 : vector<256x1xf32> to vector<256x256xf32>
    %6 = arith.addf %3, %5 : vector<256x256xf32>
    %7 = math.roundeven %6 : vector<256x256xf32>
    %c0_6 = arith.constant 0 : index
    %c0_7 = arith.constant 0 : index
    %8 = vector.load %arg5[%c0_6, %c0_7] : memref<8x256xf32, #tpu.memory_space<vmem>>, vector<8x256xf32>
    %cst_8 = arith.constant dense<0.000000e+00> : vector<8x256xf32>
    %9 = tpu.matmul %8, %7, %cst_8 {dimension_numbers = #tpu.dot_dimension_numbers<[1], [0], [0], [1], [0, 0, 1, 1], [], []>} : vector<8x256xf32>, vector<256x256xf32>, vector<8x256xf32> -> vector<8x256xf32>
    %c0_9 = arith.constant 0 : index
    %c0_10 = arith.constant 0 : index
    %c0_11 = arith.constant 0 : index
    %10 = vector.load %arg6[%c0_9, %c0_10, %c0_11] : memref<1x8x256xf32, #tpu.memory_space<vmem>>, vector<1x8x256xf32>
    %11 = vector.shape_cast %10 : vector<1x8x256xf32> to vector<8x256xf32>
    %12 = vector.shape_cast %9 : vector<8x256xf32> to vector<1x8x256xf32>
    tpu.vector_store %arg6[%c0_9, %c0_10, %c0_11], %12 {strides = array<i32>} : memref<1x8x256xf32, #tpu.memory_space<vmem>>, vector<1x8x256xf32>,
    return
  }
  func.func @transform_0(%arg0: i32, %arg1: i32) -> (i32, i32, i32) {
    %c0_i32 = arith.constant 0 : i32
    %c0_i32_0 = arith.constant 0 : i32
    return %arg0, %c0_i32, %arg1 : i32, i32, i32
  }
  func.func @transform_1(%arg0: i32, %arg1: i32) -> (i32, i32) {
    %c0_i32 = arith.constant 0 : i32
    %c0_i32_0 = arith.constant 0 : i32
    %c0_i32_1 = arith.constant 0 : i32
    return %c0_i32, %c0_i32_0 : i32, i32
  }
  func.func @transform_2(%arg0: i32, %arg1: i32) -> (i32, i32) {
    %c0_i32 = arith.constant 0 : i32
    %c0_i32_0 = arith.constant 0 : i32
    %c0_i32_1 = arith.constant 0 : i32
    return %c0_i32, %c0_i32_0 : i32, i32
  }
  func.func @transform_3(%arg0: i32, %arg1: i32) -> (i32, i32) {
    %c0_i32 = arith.constant 0 : i32
    %c0_i32_0 = arith.constant 0 : i32
    %c0_i32_1 = arith.constant 0 : i32
    return %c0_i32, %c0_i32_0 : i32, i32
  }
  func.func @transform_4(%arg0: i32, %arg1: i32) -> (i32, i32, i32) {
    %c0_i32 = arith.constant 0 : i32
    %c0_i32_0 = arith.constant 0 : i32
    return %arg0, %c0_i32, %arg1 : i32, i32, i32
  }
}

</mosaic_0001>

<llo_original>
// kernel: tpu_custom_call.1
$region0: #{tpu_custom_call.1}
  #allocation0 [shape = 'u32[]', space=smem, size = 0x4, offset = 0x4, fixed_abs, tag = 'smem constant byte address 0x4 - core index']
  #allocation1 [shape = 'u32[144,128]{1,0:T(1,128)}', space=vmem, size = 0x12000, scoped, tag = 'internal scratch']
  %s0 = inlined_call_operand.vmem [shape: bf16[2,36,256], index: 0, kind: input, shape index: {}]
  %s1 = inlined_call_operand.vmem [shape: bf16[256,36], index: 1, kind: input, shape index: {}]
  %s2 = inlined_call_operand.vmem [shape: f32[256,1], index: 2, kind: input, shape index: {}]
  %s3 = inlined_call_operand.vmem [shape: f32[8,256], index: 3, kind: input, shape index: {}]
  %s4 = inlined_call_operand.hbm [shape: f32[2,8,256], index: 4, kind: output, shape index: {}]
  %s5 = sld [smem:[#allocation0]]
  $region49: #{tpu_custom_call.1} parent=0
    _
  %s7 = ssub.s32 1, %s5
  %s8 = scalar_select 0, %s7, %s5
  $region1: #{tpu_custom_call.1} parent=0
    #allocation2 [shape = 'u8[16384]{0}', space=vmem, size = 0x4000, scoped, tag = 'output window, operand 0']
    #allocation3 [shape = 's32[2]{0}', space=sflag, size = 0x8, scoped, tag = 'scoped memory for tpu_custom_call.1']
    %9 = vsyncpa [#allocation3], 0
    %s10 = scalar_lea.sflag [#allocation3], 1
    %11 = vsyncpa %s10, 0
    loop: start=0, step=1, limit=4
    $region2: #{tpu_custom_call.1} parent=1 // loop_pre_header
      _
    $region3: #{tpu_custom_call.1} parent=1 // loop_header
      %s13 = sphi 0, %s17
      %p14 = scmp.ge.s32.totalorder %s13, 4
      %s20 = sphi 0, %s32
      %s21 = sphi 0, %s28
      %s22 = sphi 0, %s20
      %s23 = sphi 0, %s21
      %s24 = sphi 0, %s22
      %s25 = sphi 0, %s23
      %s37 = sphi 0, %s39
      %s40 = sphi 0, %s37
      %s41 = sphi 0, %s40
      %s57 = sphi 0, %s41
      %s61 = sphi 0, %s61
      %s63 = sphi 0, %s61
      %s64 = sphi 0, %s63
      %s78 = sphi 0, %s64
      %s82 = sphi 0, %s82
      %s84 = sphi 0, %s82
      %s85 = sphi 0, %s84
      %s99 = sphi 0, %s85
      %s103 = sphi 0, %s103
      %s105 = sphi 0, %s103
      %s106 = sphi 0, %s105
      %s120 = sphi 0, %s106
      %s128 = sphi 0, %s130
      %s131 = sphi 0, %s128
      %s132 = sphi 0, %s131
      %s148 = sphi 0, %s132
    $region4: #{tpu_custom_call.1} parent=1 // loop_header_branch
      %16 = sbr.rel (%p14) target = $region8
    $region5: #{tpu_custom_call.1} parent=1 // loop_body
      %s18 = ssub.s32 %s13, 1
      %s19 = ssub.s32 %s13, 2
      %s26 = sadd.s32 1, %s21
      %p27 = scmp.ge.s32.totalorder %s26, 1
      %s28 = scalar_select %p27, 0, %s26
      %s29 = sadd.s32 1, %s20
      %s30 = scalar_select %p27, %s29, %s20
      %p31 = scmp.ge.s32.totalorder %s30, 2
      %s32 = scalar_select %p31, 0, %s30
      %s33 = ssub.s32 %s20, %s32
      %s34 = ssub.s32 %s21, %s28
      %s35 = sor.u32 %s33, %s34
      %p36 = scmp.eq.s32.totalorder %s35, 0
      %s38 = sadd.s32 %s37, 1
      %s39 = scalar_select %p36, %s37, %s38
      %p42 = pneg %p36
      %p43 = scmp.eq.s32.totalorder %s13, 1
      %p44 = por %p42, %p43
      %p45 = scmp.ne.s32.totalorder %s37, %s40
      %p46 = scmp.eq.s32.totalorder %s13, 0
      %p47 = por %p45, %p46
      %p48 = scmp.ne.s32.totalorder %s37, %s40
      %p49 = scmp.eq.s32.totalorder %s18, 1
      %p50 = por %p48, %p49
      %p51 = scmp.ne.s32.totalorder %s40, %s41
      %p52 = scmp.eq.s32.totalorder %s18, 0
      %p53 = por %p51, %p52
      %p54 = scmp.ne.s32.totalorder %s40, %s41
      %p55 = scmp.eq.s32.totalorder %s19, 1
      %p56 = por %p54, %p55
      %p58 = scmp.ne.s32.totalorder %s41, %s57
      %p59 = scmp.eq.s32.totalorder %s19, 0
      %p60 = por %p58, %p59
      %s62 = sadd.s32 %s61, 1
      %p65 = scmp.eq.s32.totalorder %s13, 1
      %p66 = scmp.ne.s32.totalorder %s61, %s63
      %p67 = scmp.eq.s32.totalorder %s13, 0
      %p68 = por %p66, %p67
      %p69 = scmp.ne.s32.totalorder %s61, %s63
      %p70 = scmp.eq.s32.totalorder %s18, 1
      %p71 = por %p69, %p70
      %p72 = scmp.ne.s32.totalorder %s63, %s64
      %p73 = scmp.eq.s32.totalorder %s18, 0
      %p74 = por %p72, %p73
      %p75 = scmp.ne.s32.totalorder %s63, %s64
      %p76 = scmp.eq.s32.totalorder %s19, 1
      %p77 = por %p75, %p76
      %p79 = scmp.ne.s32.totalorder %s64, %s78
      %p80 = scmp.eq.s32.totalorder %s19, 0
      %p81 = por %p79, %p80
      %s83 = sadd.s32 %s82, 1
      %p86 = scmp.eq.s32.totalorder %s13, 1
      %p87 = scmp.ne.s32.totalorder %s82, %s84
      %p88 = scmp.eq.s32.totalorder %s13, 0
      %p89 = por %p87, %p88
      %p90 = scmp.ne.s32.totalorder %s82, %s84
      %p91 = scmp.eq.s32.totalorder %s18, 1
      %p92 = por %p90, %p91
      %p93 = scmp.ne.s32.totalorder %s84, %s85
      %p94 = scmp.eq.s32.totalorder %s18, 0
      %p95 = por %p93, %p94
      %p96 = scmp.ne.s32.totalorder %s84, %s85
      %p97 = scmp.eq.s32.totalorder %s19, 1
      %p98 = por %p96, %p97
      %p100 = scmp.ne.s32.totalorder %s85, %s99
      %p101 = scmp.eq.s32.totalorder %s19, 0
      %p102 = por %p100, %p101
      %s104 = sadd.s32 %s103, 1
      %p107 = scmp.eq.s32.totalorder %s13, 1
      %p108 = scmp.ne.s32.totalorder %s103, %s105
      %p109 = scmp.eq.s32.totalorder %s13, 0
      %p110 = por %p108, %p109
      %p111 = scmp.ne.s32.totalorder %s103, %s105
      %p112 = scmp.eq.s32.totalorder %s18, 1
      %p113 = por %p111, %p112
      %p114 = scmp.ne.s32.totalorder %s105, %s106
      %p115 = scmp.eq.s32.totalorder %s18, 0
      %p116 = por %p114, %p115
      %p117 = scmp.ne.s32.totalorder %s105, %s106
      %p118 = scmp.eq.s32.totalorder %s19, 1
      %p119 = por %p117, %p118
      %p121 = scmp.ne.s32.totalorder %s106, %s120
      %p122 = scmp.eq.s32.totalorder %s19, 0
      %p123 = por %p121, %p122
      %s124 = ssub.s32 %s20, %s32
      %s125 = ssub.s32 %s21, %s28
      %s126 = sor.u32 %s124, %s125
      %p127 = scmp.eq.s32.totalorder %s126, 0
      %s129 = sadd.s32 %s128, 1
      %s130 = scalar_select %p127, %s128, %s129
      %p133 = pneg %p127
      %p134 = scmp.eq.s32.totalorder %s13, 1
      %p135 = por %p133, %p134
      %p136 = scmp.ne.s32.totalorder %s128, %s131
      %p137 = scmp.eq.s32.totalorder %s13, 0
      %p138 = por %p136, %p137
      %p139 = scmp.ne.s32.totalorder %s128, %s131
      %p140 = scmp.eq.s32.totalorder %s18, 1
      %p141 = por %p139, %p140
      %p142 = scmp.ne.s32.totalorder %s131, %s132
      %p143 = scmp.eq.s32.totalorder %s18, 0
      %p144 = por %p142, %p143
      %p145 = scmp.ne.s32.totalorder %s131, %s132
      %p146 = scmp.eq.s32.totalorder %s19, 1
      %p147 = por %p145, %p146
      %p149 = scmp.ne.s32.totalorder %s132, %s148
      %p150 = scmp.eq.s32.totalorder %s19, 0
      %p151 = por %p149, %p150
      %p152 = scmp.le.s32.totalorder 1, %s13
      %p153 = scmp.lt.s32.totalorder %s13, 3
      %p154 = pnand %p152, %p153
      %p155 = pneg %p154
      // Predicated region
      $region9: #{tpu_custom_call.1} parent=5 // pred_check
        _
      $region10: #{tpu_custom_call.1} parent=5 // pred_check_branch
        %157 = sbr.rel (%p154) target = $region12
      $region11: #{tpu_custom_call.1} parent=5 // pred_region
        %s158 = ssub.s32 %s13, 1
        // Predicated region
        $region13: #{tpu_custom_call.1} parent=11 // pred_check
          %p159 = pneg %p74
        $region14: #{tpu_custom_call.1} parent=11 // pred_check_branch
          %161 = sbr.rel (%p159) target = $region16
        $region15: #{tpu_custom_call.1} parent=11 // pred_region
          _
        $region16: #{tpu_custom_call.1} parent=11 // pred_fallthru
          _
        // Predicated region
        $region17: #{tpu_custom_call.1} parent=11 // pred_check
          %p162 = pneg %p95
        $region18: #{tpu_custom_call.1} parent=11 // pred_check_branch
          %164 = sbr.rel (%p162) target = $region20
        $region19: #{tpu_custom_call.1} parent=11 // pred_region
          _
        $region20: #{tpu_custom_call.1} parent=11 // pred_fallthru
          _
        // Predicated region
        $region21: #{tpu_custom_call.1} parent=11 // pred_check
          %p165 = pneg %p116
        $region22: #{tpu_custom_call.1} parent=11 // pred_check_branch
          %167 = sbr.rel (%p165) target = $region24
        $region23: #{tpu_custom_call.1} parent=11 // pred_region
          _
        $region24: #{tpu_custom_call.1} parent=11 // pred_fallthru
          _
      $region12: #{tpu_custom_call.1} parent=5 // pred_fallthru
        _
      %p168 = scmp.lt.s32.totalorder %s13, 2
      // Predicated region
      $region25: #{tpu_custom_call.1} parent=5 // pred_check
        %p169 = pneg %p168
      $region26: #{tpu_custom_call.1} parent=5 // pred_check_branch
        %171 = sbr.rel (%p169) target = $region28
      $region27: #{tpu_custom_call.1} parent=5 // pred_region
        // Predicated region
        $region29: #{tpu_custom_call.1} parent=27 // pred_check
          %p172 = pneg %p47
        $region30: #{tpu_custom_call.1} parent=27 // pred_check_branch
          %174 = sbr.rel (%p172) target = $region32
        $region31: #{tpu_custom_call.1} parent=27 // pred_region
          %s175 = smul.u32 2, %s21
          %p176 = scmp.lt.s32.totalorder %s20, 1
          %s177 = scalar_select %p176, %s20, 1
          %p178 = scmp.lt.s32.totalorder %s175, 1
          %s179 = scalar_select %p178, %s175, 1
          %s180 = smul.addr %s177, 10
          %s181 = sadd.s32 %s179, %s180
          %s182 = smul.addr %s181, 4
          %s183 = scalar_lea.vmem %s0, %s182
          %s184 = smul.u32 2, %s21
        $region32: #{tpu_custom_call.1} parent=27 // pred_fallthru
          _
      $region28: #{tpu_custom_call.1} parent=5 // pred_fallthru
        _
      %p185 = scmp.le.s32.totalorder 1, %s13
      %p186 = scmp.lt.s32.totalorder %s13, 3
      %p187 = pnand %p185, %p186
      %p188 = pneg %p187
      // Predicated region
      $region33: #{tpu_custom_call.1} parent=5 // pred_check
        _
      $region34: #{tpu_custom_call.1} parent=5 // pred_check_branch
        %190 = sbr.rel (%p187) target = $region36
      $region35: #{tpu_custom_call.1} parent=5 // pred_region
        %s191 = ssub.s32 %s13, 1
        %s192 = smul.u32 2, %s23
        %p193 = scmp.lt.s32.totalorder %s22, 1
        %s194 = scalar_select %p193, %s22, 1
        %p195 = scmp.lt.s32.totalorder %s192, 1
        %s196 = scalar_select %p195, %s192, 1
        %s197 = smul.addr %s194, 10
        %s198 = sadd.s32 %s196, %s197
        %s199 = smul.addr %s198, 4
        %s200 = scalar_lea.vmem %s0, %s199
        %p201 = pneg %p53
        %p202 = pneg %p50
        %p203 = pneg %p74
        %p204 = pneg %p71
        %p205 = pneg %p95
        %p206 = pneg %p92
        %p207 = pneg %p116
        %p208 = pneg %p113
        %p209 = pneg %p144
        %p210 = pneg %p141
        %s211 = sand.u32 %s131, 1
        %s212 = scalar_lea.sflag [#allocation3], %s211
        %s213 = sand.u32 %s131, 1
        %s214 = smul.addr %s213, 16
        %s215 = scalar_lea.vmem [#allocation2], %s214
        %s216 = smul.u32 2, %s23
        %p217 = scmp.lt.s32.totalorder %s22, 1
        %s218 = scalar_select %p217, %s22, 1
        %p219 = scmp.lt.s32.totalorder %s216, 1
        %s220 = scalar_select %p219, %s216, 1
        %s221 = smul.addr %s218, 10
        %s222 = sadd.s32 %s220, %s221
        %s223 = smul.addr %s222, 4
        %s224 = scalar_lea.vmem %s0, %s223
        %s225 = smul.u32 2, %s23
        %s226 = smul.u32 2, %s23
        %v228 = vld [vmem:[%s1] sm:$0xf]
        %v229 = vld [vmem:[%s1 + $0x4] sm:$0xf]
        %v230 = vld [vmem:[%s1 + $0x8] sm:$0xf]
        %v231 = vld [vmem:[%s1 + $0xc] sm:$0xf]
        %v232 = vld [vmem:[%s1 + $0x10] sm:$0xf]
        %v233 = vld [vmem:[%s1 + $0x14] sm:$0xf]
        %v234 = vld [vmem:[%s1 + $0x18] sm:$0xf]
        %v235 = vld [vmem:[%s1 + $0x1c] sm:$0xf]
        %v236 = vld [vmem:[%s1 + $0x20] sm:$0xf]
        %v237 = vld [vmem:[%s1 + $0x24] sm:$0xf]
        %v238 = vld [vmem:[%s1 + $0x28] sm:$0xf]
        %v239 = vld [vmem:[%s1 + $0x2c] sm:$0xf]
        %v240 = vld [vmem:[%s1 + $0x30] sm:$0xf]
        %v241 = vld [vmem:[%s1 + $0x34] sm:$0xf]
        %v242 = vld [vmem:[%s1 + $0x38] sm:$0xf]
        %v243 = vld [vmem:[%s1 + $0x3c] sm:$0xf]
        %v244 = vld [vmem:[%s1 + $0x40] sm:$0xf]
        %v245 = vld [vmem:[%s1 + $0x44] sm:$0xf]
        %v246 = vld [vmem:[%s1 + $0x48] sm:$0xf]
        %v247 = vld [vmem:[%s1 + $0x4c] sm:$0xf]
        %v248 = vld [vmem:[%s1 + $0x50] sm:$0xf]
        %v249 = vld [vmem:[%s1 + $0x54] sm:$0xf]
        %v250 = vld [vmem:[%s1 + $0x58] sm:$0xf]
        %v251 = vld [vmem:[%s1 + $0x5c] sm:$0xf]
        %v252 = vld [vmem:[%s1 + $0x60] sm:$0xf]
        %v253 = vld [vmem:[%s1 + $0x64] sm:$0xf]
        %v254 = vld [vmem:[%s1 + $0x68] sm:$0xf]
        %v255 = vld [vmem:[%s1 + $0x6c] sm:$0xf]
        %v256 = vld [vmem:[%s1 + $0x70] sm:$0xf]
        %v257 = vld [vmem:[%s1 + $0x74] sm:$0xf]
        %v258 = vld [vmem:[%s1 + $0x78] sm:$0xf]
        %v259 = vld [vmem:[%s1 + $0x7c] sm:$0xf]
        %v260 = vld [vmem:[%s224] sm:$0xff]
        %v261 = vld [vmem:[%s224 + $0x8] sm:$0xff]
        %v262 = vld [vmem:[%s224 + $0x10] sm:$0xff]
        %v263 = vld [vmem:[%s224 + $0x18] sm:$0xff]
        %v264 = vld [vmem:[%s224 + $0x20] sm:$0x33]
        %v265 = vld [vmem:[%s2] sm:$0xff]
        %v266 = vld [vmem:[%s2 + $0x8] sm:$0xff]
        %v267 = vld [vmem:[%s2 + $0x10] sm:$0xff]
        %v268 = vld [vmem:[%s2 + $0x18] sm:$0xff]
        %v269 = vld [vmem:[%s2 + $0x20] sm:$0xff]
        %v270 = vld [vmem:[%s2 + $0x28] sm:$0xff]
        %v271 = vld [vmem:[%s2 + $0x30] sm:$0xff]
        %v272 = vld [vmem:[%s2 + $0x38] sm:$0xff]
        %v273 = vld [vmem:[%s2 + $0x40] sm:$0xff]
        %v274 = vld [vmem:[%s2 + $0x48] sm:$0xff]
        %v275 = vld [vmem:[%s2 + $0x50] sm:$0xff]
        %v276 = vld [vmem:[%s2 + $0x58] sm:$0xff]
        %v277 = vld [vmem:[%s2 + $0x60] sm:$0xff]
        %v278 = vld [vmem:[%s2 + $0x68] sm:$0xff]
        %v279 = vld [vmem:[%s2 + $0x70] sm:$0xff]
        %v280 = vld [vmem:[%s2 + $0x78] sm:$0xff]
        %v281 = vld [vmem:[%s2 + $0x80] sm:$0xff]
        %v282 = vld [vmem:[%s2 + $0x88] sm:$0xff]
        %v283 = vld [vmem:[%s2 + $0x90] sm:$0xff]
        %v284 = vld [vmem:[%s2 + $0x98] sm:$0xff]
        %v285 = vld [vmem:[%s2 + $0xa0] sm:$0xff]
        %v286 = vld [vmem:[%s2 + $0xa8] sm:$0xff]
        %v287 = vld [vmem:[%s2 + $0xb0] sm:$0xff]
        %v288 = vld [vmem:[%s2 + $0xb8] sm:$0xff]
        %v289 = vld [vmem:[%s2 + $0xc0] sm:$0xff]
        %v290 = vld [vmem:[%s2 + $0xc8] sm:$0xff]
        %v291 = vld [vmem:[%s2 + $0xd0] sm:$0xff]
        %v292 = vld [vmem:[%s2 + $0xd8] sm:$0xff]
        %v293 = vld [vmem:[%s2 + $0xe0] sm:$0xff]
        %v294 = vld [vmem:[%s2 + $0xe8] sm:$0xff]
        %v295 = vld [vmem:[%s2 + $0xf0] sm:$0xff]
        %v296 = vld [vmem:[%s2 + $0xf8] sm:$0xff]
        %298 = vset.pattern.permute.xlu0 0
        %299 = vperm.xlu0 %298, %v265
        %v300 = vpop.permute.xlu0 %299
        %303 = vset.pattern.permute.xlu0 0
        %304 = vperm.xlu0 %303, %v266
        %v305 = vpop.permute.xlu0 %304
        %308 = vset.pattern.permute.xlu0 0
        %309 = vperm.xlu0 %308, %v267
        %v310 = vpop.permute.xlu0 %309
        %313 = vset.pattern.permute.xlu0 0
        %314 = vperm.xlu0 %313, %v268
        %v315 = vpop.permute.xlu0 %314
        %318 = vset.pattern.permute.xlu0 0
        %319 = vperm.xlu0 %318, %v269
        %v320 = vpop.permute.xlu0 %319
        %323 = vset.pattern.permute.xlu0 0
        %324 = vperm.xlu0 %323, %v270
        %v325 = vpop.permute.xlu0 %324
        %328 = vset.pattern.permute.xlu0 0
        %329 = vperm.xlu0 %328, %v271
        %v330 = vpop.permute.xlu0 %329
        %333 = vset.pattern.permute.xlu0 0
        %334 = vperm.xlu0 %333, %v272
        %v335 = vpop.permute.xlu0 %334
        %338 = vset.pattern.permute.xlu0 0
        %339 = vperm.xlu0 %338, %v273
        %v340 = vpop.permute.xlu0 %339
        %343 = vset.pattern.permute.xlu0 0
        %344 = vperm.xlu0 %343, %v274
        %v345 = vpop.permute.xlu0 %344
        %348 = vset.pattern.permute.xlu0 0
        %349 = vperm.xlu0 %348, %v275
        %v350 = vpop.permute.xlu0 %349
        %353 = vset.pattern.permute.xlu0 0
        %354 = vperm.xlu0 %353, %v276
        %v355 = vpop.permute.xlu0 %354
        %358 = vset.pattern.permute.xlu0 0
        %359 = vperm.xlu0 %358, %v277
        %v360 = vpop.permute.xlu0 %359
        %363 = vset.pattern.permute.xlu0 0
        %364 = vperm.xlu0 %363, %v278
        %v365 = vpop.permute.xlu0 %364
        %368 = vset.pattern.permute.xlu0 0
        %369 = vperm.xlu0 %368, %v279
        %v370 = vpop.permute.xlu0 %369
        %373 = vset.pattern.permute.xlu0 0
        %374 = vperm.xlu0 %373, %v280
        %v375 = vpop.permute.xlu0 %374
        %378 = vset.pattern.permute.xlu0 0
        %379 = vperm.xlu0 %378, %v281
        %v380 = vpop.permute.xlu0 %379
        %383 = vset.pattern.permute.xlu0 0
        %384 = vperm.xlu0 %383, %v282
        %v385 = vpop.permute.xlu0 %384
        %388 = vset.pattern.permute.xlu0 0
        %389 = vperm.xlu0 %388, %v283
        %v390 = vpop.permute.xlu0 %389
        %393 = vset.pattern.permute.xlu0 0
        %394 = vperm.xlu0 %393, %v284
        %v395 = vpop.permute.xlu0 %394
        %398 = vset.pattern.permute.xlu0 0
        %399 = vperm.xlu0 %398, %v285
        %v400 = vpop.permute.xlu0 %399
        %403 = vset.pattern.permute.xlu0 0
        %404 = vperm.xlu0 %403, %v286
        %v405 = vpop.permute.xlu0 %404
        %408 = vset.pattern.permute.xlu0 0
        %409 = vperm.xlu0 %408, %v287
        %v410 = vpop.permute.xlu0 %409
        %413 = vset.pattern.permute.xlu0 0
        %414 = vperm.xlu0 %413, %v288
        %v415 = vpop.permute.xlu0 %414
        %418 = vset.pattern.permute.xlu0 0
        %419 = vperm.xlu0 %418, %v289
        %v420 = vpop.permute.xlu0 %419
        %423 = vset.pattern.permute.xlu0 0
        %424 = vperm.xlu0 %423, %v290
        %v425 = vpop.permute.xlu0 %424
        %428 = vset.pattern.permute.xlu0 0
        %429 = vperm.xlu0 %428, %v291
        %v430 = vpop.permute.xlu0 %429
        %433 = vset.pattern.permute.xlu0 0
        %434 = vperm.xlu0 %433, %v292
        %v435 = vpop.permute.xlu0 %434
        %438 = vset.pattern.permute.xlu0 0
        %439 = vperm.xlu0 %438, %v293
        %v440 = vpop.permute.xlu0 %439
        %443 = vset.pattern.permute.xlu0 0
        %444 = vperm.xlu0 %443, %v294
        %v445 = vpop.permute.xlu0 %444
        %448 = vset.pattern.permute.xlu0 0
        %449 = vperm.xlu0 %448, %v295
        %v450 = vpop.permute.xlu0 %449
        %453 = vset.pattern.permute.xlu0 0
        %454 = vperm.xlu0 %453, %v296
        %v455 = vpop.permute.xlu0 %454
        %v489 = vunpack.c.l.b16 %v228
        %v490 = vunpack.c.l.b16 %v229
        %v491 = vunpack.c.l.b16 %v230
        %v492 = vunpack.c.l.b16 %v231
        %v493 = vunpack.c.l.b16 %v232
        %v494 = vunpack.c.l.b16 %v233
        %v495 = vunpack.c.l.b16 %v234
        %v496 = vunpack.c.l.b16 %v235
        %v497 = vunpack.c.l.b16 %v236
        %v498 = vunpack.c.l.b16 %v237
        %v499 = vunpack.c.l.b16 %v238
        %v500 = vunpack.c.l.b16 %v239
        %v501 = vunpack.c.l.b16 %v240
        %v502 = vunpack.c.l.b16 %v241
        %v503 = vunpack.c.l.b16 %v242
        %v504 = vunpack.c.l.b16 %v243
        %v505 = vunpack.c.l.b16 %v244
        %v506 = vunpack.c.l.b16 %v245
        %v507 = vunpack.c.l.b16 %v246
        %v508 = vunpack.c.l.b16 %v247
        %v509 = vunpack.c.l.b16 %v248
        %v510 = vunpack.c.l.b16 %v249
        %v511 = vunpack.c.l.b16 %v250
        %v512 = vunpack.c.l.b16 %v251
        %v513 = vunpack.c.l.b16 %v252
        %v514 = vunpack.c.l.b16 %v253
        %v515 = vunpack.c.l.b16 %v254
        %v516 = vunpack.c.l.b16 %v255
        %v517 = vunpack.c.l.b16 %v256
        %v518 = vunpack.c.l.b16 %v257
        %v519 = vunpack.c.l.b16 %v258
        %v520 = vunpack.c.l.b16 %v259
        %v521 = vpack.c.b16 %v490, %v489
        %v522 = vpack.c.b16 %v492, %v491
        %v523 = vpack.c.b16 %v494, %v493
        %v524 = vpack.c.b16 %v496, %v495
        %v525 = vpack.c.b16 %v498, %v497
        %v526 = vpack.c.b16 %v500, %v499
        %v527 = vpack.c.b16 %v502, %v501
        %v528 = vpack.c.b16 %v504, %v503
        %v529 = vpack.c.b16 %v506, %v505
        %v530 = vpack.c.b16 %v508, %v507
        %v531 = vpack.c.b16 %v510, %v509
        %v532 = vpack.c.b16 %v512, %v511
        %v533 = vpack.c.b16 %v514, %v513
        %v534 = vpack.c.b16 %v516, %v515
        %v535 = vpack.c.b16 %v518, %v517
        %v536 = vpack.c.b16 %v520, %v519
        %v542 = vunpack.c.l.b16 %v260
        %v543 = vunpack.c.h.b16 %v260
        %v544 = vunpack.c.l.b16 %v261
        %v545 = vunpack.c.h.b16 %v261
        %v546 = vunpack.c.l.b16 %v262
        %v547 = vunpack.c.h.b16 %v262
        %v548 = vunpack.c.l.b16 %v263
        %v549 = vunpack.c.h.b16 %v263
        %v550 = vunpack.c.l.b16 %v264
        %v551 = vunpack.c.h.b16 %v264
        %v552 = vpack.c.b16 %v544, %v542
        %v553 = vpack.c.b16 %v545, %v543
        %v554 = vpack.c.b16 %v548, %v546
        %v555 = vpack.c.b16 %v549, %v547
        %v556 = vpack.c.b16 %v550, %v550
        %v557 = vpack.c.b16 %v551, %v551
        %vm562 = vcmask 293888
        %v564 = vsel %vm562, %v521, 0
        %v567 = vsel %vm562, %v522, 0
        %v570 = vsel %vm562, %v523, 0
        %v573 = vsel %vm562, %v524, 0
        %v576 = vsel %vm562, %v525, 0
        %v579 = vsel %vm562, %v526, 0
        %v582 = vsel %vm562, %v527, 0
        %v585 = vsel %vm562, %v528, 0
        %v588 = vsel %vm562, %v529, 0
        %v591 = vsel %vm562, %v530, 0
        %v594 = vsel %vm562, %v531, 0
        %v597 = vsel %vm562, %v532, 0
        %v600 = vsel %vm562, %v533, 0
        %v603 = vsel %vm562, %v534, 0
        %v606 = vsel %vm562, %v535, 0
        %v609 = vsel %vm562, %v536, 0
        %vm611 = vcmask 1041408
        %v613 = vsel %vm611, %v556, 0
        %v616 = vsel %vm611, %v557, 0
        %618 = vmatprep.subr.bf16.mxu0 %v553
        %619 = vmatpush1.bf16.msra.mxu0 %v552
        %620 = vmatprep.subr.bf16.mxu0 %v555
        %621 = vmatpush1.bf16.msra.mxu0 %v554
        %622 = vmatprep.subr.bf16.mxu0 %v616
        %623 = vmatpush1.bf16.msra.mxu0 %v613
        %624 = vmatprep.subr.bf16.mxu0 0
        %625 = vmatpush1.bf16.msra.mxu0 0
        %626 = vmatprep.subr.bf16.mxu0 0
        %627 = vmatpush1.bf16.msra.mxu0 0
        %628 = vmatprep.subr.bf16.mxu0 0
        %629 = vmatpush1.bf16.msra.mxu0 0
        %630 = vmatprep.subr.bf16.mxu0 0
        %631 = vmatpush1.bf16.msra.mxu0 0
        %632 = vmatprep.subr.bf16.mxu0 0
        %633 = vmatpush1.bf16.msra.mxu0 0
        %634 = vmatprep.subr.bf16.mxu0 0
        %635 = vmatpush1.bf16.msra.mxu0 0
        %636 = vmatprep.subr.bf16.mxu0 0
        %637 = vmatpush1.bf16.msra.mxu0 0
        %638 = vmatprep.subr.bf16.mxu0 0
        %639 = vmatpush1.bf16.msra.mxu0 0
        %640 = vmatprep.subr.bf16.mxu0 0
        %641 = vmatpush1.bf16.msra.mxu0 0
        %642 = vmatprep.subr.bf16.mxu0 0
        %643 = vmatpush1.bf16.msra.mxu0 0
        %644 = vmatprep.subr.bf16.mxu0 0
        %645 = vmatpush1.bf16.msra.mxu0 0
        %646 = vmatprep.subr.bf16.mxu0 0
        %647 = vmatpush1.bf16.msra.mxu0 0
        %648 = vmatprep.subr.bf16.mxu0 0
        %649 = vmatpush1.bf16.msra.mxu0 0
        %650 = vmatprep.mubr.bf16.mxu0 0
        %651 = vmatmul.mubr.bf16.gmra.mrb[0].mxu0 %v564
        %v652 = vpop.f32.mrb[0].mxu0
        %v653 = vadd.f32 %v300, %v652
        %v654 = vpop.f32.mrb[0].mxu0
        %v655 = vadd.f32 %v300, %v654
        %v656 = vpop.f32.mrb[0].mxu0
        %v657 = vadd.f32 %v305, %v656
        %v658 = vpop.f32.mrb[0].mxu0
        %v659 = vadd.f32 %v305, %v658
        %660 = vmatprep.mubr.bf16.mxu0 0
        %661 = vmatmul.mubr.bf16.gmra.mrb[0].mxu0 %v567
        %v662 = vpop.f32.mrb[0].mxu0
        %v663 = vadd.f32 %v310, %v662
        %v664 = vpop.f32.mrb[0].mxu0
        %v665 = vadd.f32 %v310, %v664
        %v666 = vpop.f32.mrb[0].mxu0
        %v667 = vadd.f32 %v315, %v666
        %v668 = vpop.f32.mrb[0].mxu0
        %v669 = vadd.f32 %v315, %v668
        %670 = vmatprep.mubr.bf16.mxu0 0
        %671 = vmatmul.mubr.bf16.gmra.mrb[0].mxu0 %v570
        %v672 = vpop.f32.mrb[0].mxu0
        %v673 = vadd.f32 %v320, %v672
        %v674 = vpop.f32.mrb[0].mxu0
        %v675 = vadd.f32 %v320, %v674
        %v676 = vpop.f32.mrb[0].mxu0
        %v677 = vadd.f32 %v325, %v676
        %v678 = vpop.f32.mrb[0].mxu0
        %v679 = vadd.f32 %v325, %v678
        %680 = vmatprep.mubr.bf16.mxu0 0
        %681 = vmatmul.mubr.bf16.gmra.mrb[0].mxu0 %v573
        %v682 = vpop.f32.mrb[0].mxu0
        %v683 = vadd.f32 %v330, %v682
        %v684 = vpop.f32.mrb[0].mxu0
        %v685 = vadd.f32 %v330, %v684
        %v686 = vpop.f32.mrb[0].mxu0
        %v687 = vadd.f32 %v335, %v686
        %v688 = vpop.f32.mrb[0].mxu0
        %v689 = vadd.f32 %v335, %v688
        %690 = vmatprep.mubr.bf16.mxu0 0
        %691 = vmatmul.mubr.bf16.gmra.mrb[0].mxu0 %v576
        %v692 = vpop.f32.mrb[0].mxu0
        %v693 = vadd.f32 %v340, %v692
        %v694 = vpop.f32.mrb[0].mxu0
        %v695 = vadd.f32 %v340, %v694
        %v696 = vpop.f32.mrb[0].mxu0
        %v697 = vadd.f32 %v345, %v696
        %v698 = vpop.f32.mrb[0].mxu0
        %v699 = vadd.f32 %v345, %v698
        %700 = vmatprep.mubr.bf16.mxu0 0
        %701 = vmatmul.mubr.bf16.gmra.mrb[0].mxu0 %v579
        %v702 = vpop.f32.mrb[0].mxu0
        %v703 = vadd.f32 %v350, %v702
        %v704 = vpop.f32.mrb[0].mxu0
        %v705 = vadd.f32 %v350, %v704
        %v706 = vpop.f32.mrb[0].mxu0
        %v707 = vadd.f32 %v355, %v706
        %v708 = vpop.f32.mrb[0].mxu0
        %v709 = vadd.f32 %v355, %v708
        %710 = vmatprep.mubr.bf16.mxu0 0
        %711 = vmatmul.mubr.bf16.gmra.mrb[0].mxu0 %v582
        %v712 = vpop.f32.mrb[0].mxu0
        %v713 = vadd.f32 %v360, %v712
        %v714 = vpop.f32.mrb[0].mxu0
        %v715 = vadd.f32 %v360, %v714
        %v716 = vpop.f32.mrb[0].mxu0
        %v717 = vadd.f32 %v365, %v716
        %v718 = vpop.f32.mrb[0].mxu0
        %v719 = vadd.f32 %v365, %v718
        %720 = vmatprep.mubr.bf16.mxu0 0
        %721 = vmatmul.mubr.bf16.gmra.mrb[0].mxu0 %v585
        %v722 = vpop.f32.mrb[0].mxu0
        %v723 = vadd.f32 %v370, %v722
        %v724 = vpop.f32.mrb[0].mxu0
        %v725 = vadd.f32 %v370, %v724
        %v726 = vpop.f32.mrb[0].mxu0
        %v727 = vadd.f32 %v375, %v726
        %v728 = vpop.f32.mrb[0].mxu0
        %v729 = vadd.f32 %v375, %v728
        %730 = vmatprep.mubr.bf16.mxu0 0
        %731 = vmatmul.mubr.bf16.gmra.mrb[0].mxu0 %v588
        %v732 = vpop.f32.mrb[0].mxu0
        %v733 = vadd.f32 %v380, %v732
        %v734 = vpop.f32.mrb[0].mxu0
        %v735 = vadd.f32 %v380, %v734
        %v736 = vpop.f32.mrb[0].mxu0
        %v737 = vadd.f32 %v385, %v736
        %v738 = vpop.f32.mrb[0].mxu0
        %v739 = vadd.f32 %v385, %v738
        %740 = vmatprep.mubr.bf16.mxu0 0
        %741 = vmatmul.mubr.bf16.gmra.mrb[0].mxu0 %v591
        %v742 = vpop.f32.mrb[0].mxu0
        %v743 = vadd.f32 %v390, %v742
        %v744 = vpop.f32.mrb[0].mxu0
        %v745 = vadd.f32 %v390, %v744
        %v746 = vpop.f32.mrb[0].mxu0
        %v747 = vadd.f32 %v395, %v746
        %v748 = vpop.f32.mrb[0].mxu0
        %v749 = vadd.f32 %v395, %v748
        %750 = vmatprep.mubr.bf16.mxu0 0
        %751 = vmatmul.mubr.bf16.gmra.mrb[0].mxu0 %v594
        %v752 = vpop.f32.mrb[0].mxu0
        %v753 = vadd.f32 %v400, %v752
        %v754 = vpop.f32.mrb[0].mxu0
        %v755 = vadd.f32 %v400, %v754
        %v756 = vpop.f32.mrb[0].mxu0
        %v757 = vadd.f32 %v405, %v756
        %v758 = vpop.f32.mrb[0].mxu0
        %v759 = vadd.f32 %v405, %v758
        %760 = vmatprep.mubr.bf16.mxu0 0
        %761 = vmatmul.mubr.bf16.gmra.mrb[0].mxu0 %v597
        %v762 = vpop.f32.mrb[0].mxu0
        %v763 = vadd.f32 %v410, %v762
        %v764 = vpop.f32.mrb[0].mxu0
        %v765 = vadd.f32 %v410, %v764
        %v766 = vpop.f32.mrb[0].mxu0
        %v767 = vadd.f32 %v415, %v766
        %v768 = vpop.f32.mrb[0].mxu0
        %v769 = vadd.f32 %v415, %v768
        %770 = vmatprep.mubr.bf16.mxu0 0
        %771 = vmatmul.mubr.bf16.gmra.mrb[0].mxu0 %v600
        %v772 = vpop.f32.mrb[0].mxu0
        %v773 = vadd.f32 %v420, %v772
        %v774 = vpop.f32.mrb[0].mxu0
        %v775 = vadd.f32 %v420, %v774
        %v776 = vpop.f32.mrb[0].mxu0
        %v777 = vadd.f32 %v425, %v776
        %v778 = vpop.f32.mrb[0].mxu0
        %v779 = vadd.f32 %v425, %v778
        %780 = vmatprep.mubr.bf16.mxu0 0
        %781 = vmatmul.mubr.bf16.gmra.mrb[0].mxu0 %v603
        %v782 = vpop.f32.mrb[0].mxu0
        %v783 = vadd.f32 %v430, %v782
        %v784 = vpop.f32.mrb[0].mxu0
        %v785 = vadd.f32 %v430, %v784
        %v786 = vpop.f32.mrb[0].mxu0
        %v787 = vadd.f32 %v435, %v786
        %v788 = vpop.f32.mrb[0].mxu0
        %v789 = vadd.f32 %v435, %v788
        %790 = vmatprep.mubr.bf16.mxu0 0
        %791 = vmatmul.mubr.bf16.gmra.mrb[0].mxu0 %v606
        %v792 = vpop.f32.mrb[0].mxu0
        %v793 = vadd.f32 %v440, %v792
        %v794 = vpop.f32.mrb[0].mxu0
        %v795 = vadd.f32 %v440, %v794
        %v796 = vpop.f32.mrb[0].mxu0
        %v797 = vadd.f32 %v445, %v796
        %v798 = vpop.f32.mrb[0].mxu0
        %v799 = vadd.f32 %v445, %v798
        %800 = vmatprep.mubr.bf16.mxu0 0
        %801 = vmatmul.mubr.bf16.gmra.mrb[0].mxu0 %v609
        %v802 = vpop.f32.mrb[0].mxu0
        %v803 = vadd.f32 %v450, %v802
        %v804 = vpop.f32.mrb[0].mxu0
        %v805 = vadd.f32 %v450, %v804
        %v806 = vpop.f32.mrb[0].mxu0
        %v807 = vadd.f32 %v455, %v806
        %v808 = vpop.f32.mrb[0].mxu0
        %v809 = vadd.f32 %v455, %v808
        %810 = vdwg.mxu0
        %v811 = vround.ne.pseudo %v653
        %v812 = vround.ne.pseudo %v655
        %v813 = vround.ne.pseudo %v657
        %v814 = vround.ne.pseudo %v659
        %v815 = vround.ne.pseudo %v663
        %v816 = vround.ne.pseudo %v665
        %v817 = vround.ne.pseudo %v667
        %v818 = vround.ne.pseudo %v669
        %v819 = vround.ne.pseudo %v673
        %v820 = vround.ne.pseudo %v675
        %v821 = vround.ne.pseudo %v677
        %v822 = vround.ne.pseudo %v679
        %v823 = vround.ne.pseudo %v683
        %v824 = vround.ne.pseudo %v685
        %v825 = vround.ne.pseudo %v687
        %v826 = vround.ne.pseudo %v689
        %v827 = vround.ne.pseudo %v693
        %v828 = vround.ne.pseudo %v695
        %v829 = vround.ne.pseudo %v697
        %v830 = vround.ne.pseudo %v699
        %v831 = vround.ne.pseudo %v703
        %v832 = vround.ne.pseudo %v705
        %v833 = vround.ne.pseudo %v707
        %v834 = vround.ne.pseudo %v709
        %v835 = vround.ne.pseudo %v713
        %v836 = vround.ne.pseudo %v715
        %v837 = vround.ne.pseudo %v717
        %v838 = vround.ne.pseudo %v719
        %v839 = vround.ne.pseudo %v723
        %v840 = vround.ne.pseudo %v725
        %v841 = vround.ne.pseudo %v727
        %v842 = vround.ne.pseudo %v729
        %v843 = vround.ne.pseudo %v733
        %v844 = vround.ne.pseudo %v735
        %v845 = vround.ne.pseudo %v737
        %v846 = vround.ne.pseudo %v739
        %v847 = vround.ne.pseudo %v743
        %v848 = vround.ne.pseudo %v745
        %v849 = vround.ne.pseudo %v747
        %v850 = vround.ne.pseudo %v749
        %v851 = vround.ne.pseudo %v753
        %v852 = vround.ne.pseudo %v755
        %v853 = vround.ne.pseudo %v757
        %v854 = vround.ne.pseudo %v759
        %v855 = vround.ne.pseudo %v763
        %v856 = vround.ne.pseudo %v765
        %v857 = vround.ne.pseudo %v767
        %v858 = vround.ne.pseudo %v769
        %v859 = vround.ne.pseudo %v773
        %v860 = vround.ne.pseudo %v775
        %v861 = vround.ne.pseudo %v777
        %v862 = vround.ne.pseudo %v779
        %v863 = vround.ne.pseudo %v783
        %v864 = vround.ne.pseudo %v785
        %v865 = vround.ne.pseudo %v787
        %v866 = vround.ne.pseudo %v789
        %v867 = vround.ne.pseudo %v793
        %v868 = vround.ne.pseudo %v795
        %v869 = vround.ne.pseudo %v797
        %v870 = vround.ne.pseudo %v799
        %v871 = vround.ne.pseudo %v803
        %v872 = vround.ne.pseudo %v805
        %v873 = vround.ne.pseudo %v807
        %v874 = vround.ne.pseudo %v809
        %v875 = vld [vmem:[%s3] sm:$0xff]
        %v876 = vld [vmem:[%s3 + $0x8] sm:$0xff]
        %877 = vmatprep.subr.mxu0 %v812
        %878 = vmatpush1.msra.mxu0 %v811
        %879 = vmatprep.subr.mxu0 %v814
        %880 = vmatpush1.msra.mxu0 %v813
        %881 = vmatprep.subr.mxu0 %v816
        %882 = vmatpush1.msra.mxu0 %v815
        %883 = vmatprep.subr.mxu0 %v818
        %884 = vmatpush1.msra.mxu0 %v817
        %885 = vmatprep.subr.mxu0 %v820
        %886 = vmatpush1.msra.mxu0 %v819
        %887 = vmatprep.subr.mxu0 %v822
        %888 = vmatpush1.msra.mxu0 %v821
        %889 = vmatprep.subr.mxu0 %v824
        %890 = vmatpush1.msra.mxu0 %v823
        %891 = vmatprep.subr.mxu0 %v826
        %892 = vmatpush1.msra.mxu0 %v825
        %893 = vmatprep.subr.mxu0 %v828
        %894 = vmatpush1.msra.mxu0 %v827
        %895 = vmatprep.subr.mxu0 %v830
        %896 = vmatpush1.msra.mxu0 %v829
        %897 = vmatprep.subr.mxu0 %v832
        %898 = vmatpush1.msra.mxu0 %v831
        %899 = vmatprep.subr.mxu0 %v834
        %900 = vmatpush1.msra.mxu0 %v833
        %901 = vmatprep.subr.mxu0 %v836
        %902 = vmatpush1.msra.mxu0 %v835
        %903 = vmatprep.subr.mxu0 %v838
        %904 = vmatpush1.msra.mxu0 %v837
        %905 = vmatprep.subr.mxu0 %v840
        %906 = vmatpush1.msra.mxu0 %v839
        %907 = vmatprep.subr.mxu0 %v842
        %908 = vmatpush1.msra.mxu0 %v841
        %909 = vmatprep.subr.mxu0 %v844
        %910 = vmatpush1.msra.mxu0 %v843
        %911 = vmatprep.subr.mxu0 %v846
        %912 = vmatpush1.msra.mxu0 %v845
        %913 = vmatprep.subr.mxu0 %v848
        %914 = vmatpush1.msra.mxu0 %v847
        %915 = vmatprep.subr.mxu0 %v850
        %916 = vmatpush1.msra.mxu0 %v849
        %917 = vmatprep.subr.mxu0 %v852
        %918 = vmatpush1.msra.mxu0 %v851
        %919 = vmatprep.subr.mxu0 %v854
        %920 = vmatpush1.msra.mxu0 %v853
        %921 = vmatprep.subr.mxu0 %v856
        %922 = vmatpush1.msra.mxu0 %v855
        %923 = vmatprep.subr.mxu0 %v858
        %924 = vmatpush1.msra.mxu0 %v857
        %925 = vmatprep.subr.mxu0 %v860
        %926 = vmatpush1.msra.mxu0 %v859
        %927 = vmatprep.subr.mxu0 %v862
        %928 = vmatpush1.msra.mxu0 %v861
        %929 = vmatprep.subr.mxu0 %v864
        %930 = vmatpush1.msra.mxu0 %v863
        %931 = vmatprep.subr.mxu0 %v866
        %932 = vmatpush1.msra.mxu0 %v865
        %933 = vmatprep.subr.mxu0 %v868
        %934 = vmatpush1.msra.mxu0 %v867
        %935 = vmatprep.subr.mxu0 %v870
        %936 = vmatpush1.msra.mxu0 %v869
        %937 = vmatprep.subr.mxu0 %v872
        %938 = vmatpush1.msra.mxu0 %v871
        %939 = vmatprep.subr.mxu0 %v874
        %940 = vmatpush1.msra.mxu0 %v873
        %941 = vmatprep.mubr.f32.mxu0 %v876
        %942 = vmatmul.mubr.f32.gmra.mrb[0].mxu0 %v875
        %v943 = vpop.f32.mrb[0].mxu0
        %v944 = vadd.f32 0.0, %v943
        %v945 = vpop.f32.mrb[0].mxu0
        %v946 = vadd.f32 0.0, %v945
        %947 = vdwg.mxu0
        %948 = vst [vmem:[%s215] sm:$0xff] %v944
        %949 = vst [vmem:[%s215 + $0x8] sm:$0xff] %v946
        %s950 = sand.u32 %s131, 1
        %s951 = scalar_lea.sflag [#allocation3], %s950
        %s952 = sand.u32 %s131, 1
        %s953 = smul.addr %s952, 16
        %s954 = scalar_lea.vmem [#allocation2], %s953
        // Predicated region
        $region37: #{tpu_custom_call.1} parent=35 // pred_check
          %p955 = pneg %p141
        $region38: #{tpu_custom_call.1} parent=35 // pred_check_branch
          %957 = sbr.rel (%p955) target = $region40
        $region39: #{tpu_custom_call.1} parent=35 // pred_region
          %s958 = smul.u32 2, %s23
          %s960 = ssub.s32 256, 256
          %961 = vsyncadd %s951, %s960
          %s962 = smul.addr %s22, 2
          %s963 = sadd.s32 %s958, %s962
          %s964 = smul.addr %s963, 128
          %s965 = scalar_lea.hbm %s4, %s964
          %s967 = sshll.u32 %s954, 4
          %s968 = int_to_ptr.vmem [resolvable:$true] %s967
          %970 = dma.vmem_to_hbm [thread:$0]  %s968, 256, %s965, %s951
        $region40: #{tpu_custom_call.1} parent=35 // pred_fallthru
          _
      $region36: #{tpu_custom_call.1} parent=5 // pred_fallthru
        _
      %p971 = scmp.le.s32.totalorder 2, %s13
      // Predicated region
      $region41: #{tpu_custom_call.1} parent=5 // pred_check
        %p972 = pneg %p971
      $region42: #{tpu_custom_call.1} parent=5 // pred_check_branch
        %974 = sbr.rel (%p972) target = $region44
      $region43: #{tpu_custom_call.1} parent=5 // pred_region
        %s975 = ssub.s32 %s13, 2
        // Predicated region
        $region45: #{tpu_custom_call.1} parent=43 // pred_check
          %p976 = pneg %p147
        $region46: #{tpu_custom_call.1} parent=43 // pred_check_branch
          %978 = sbr.rel (%p976) target = $region48
        $region47: #{tpu_custom_call.1} parent=43 // pred_region
          %s979 = sand.u32 %s132, 1
          %s980 = scalar_lea.sflag [#allocation3], %s979
          %s981 = sand.u32 %s132, 1
          %s982 = smul.addr %s981, 16
          %s983 = scalar_lea.vmem [#allocation2], %s982
          %984 = dma.done %s980, 256
        $region48: #{tpu_custom_call.1} parent=43 // pred_fallthru
          _
      $region44: #{tpu_custom_call.1} parent=5 // pred_fallthru
        _
    $region6: #{tpu_custom_call.1} parent=1 // loop_footer
      %s17 = sadd.s32 1, %s13
    $region7: #{tpu_custom_call.1} parent=1 // loop_footer_branch
      %12 = sbr.rel target = $region3
    $region8: #{tpu_custom_call.1} parent=1 // loop_exit
      _
    %985 = vsyncpa [#allocation3], 1
    %s986 = scalar_lea.sflag [#allocation3], 1
    %987 = vsyncpa %s986, 1

</llo_original>
